<compile_context>
chip_gen: v7x
topology: tpu7x:2x2x1
jax: 0.10.0
libtpu: 0.0.40
codegen_flags: <defaults>
</compile_context>

<pallas_src>
import jax
import jax.numpy as jnp
from jax.experimental import pallas as pl
from jax.experimental.pallas import tpu as pltpu


def _chomp_copy_kernel(x_ref, o_ref):
    # Identical (Rt, Lt) tiles for input and output: pure copy, no in-VMEM
    # slicing.  Edge tiles that extend past L_out (or past L) are clipped /
    # masked by Pallas and never written to the output.
    o_ref[...] = x_ref[...]


def _round_up(x: int, m: int) -> int:
    return ((x + m - 1) // m) * m


# Sub-32-bit dtypes pack along sublanes; keep the row tile aligned to the
# packed sublane count so no packed-vreg edge handling is introduced.
_SUBLANE_MULT = {4: 8, 2: 16, 1: 32}

# ~4 MiB per block: double-buffered in+out pipeline footprint is 4x block
# (~16 MiB), which fits the 32 MiB scoped-VMEM limit set below on every
# generation (v5e/v6e: 128 MiB physical; v7x: 64 MiB physical).
_TARGET_BLOCK_BYTES = 4 * 1024 * 1024
# Below this total output size a plain XLA slice beats any kernel launch.
_SMALL_FAST_PATH_BYTES = 1 * 1024 * 1024


def chomp1d(x: jax.Array, chomp_size: int, *, small_fast_path: bool = True) -> jax.Array:
    """Pallas implementation of Chomp1d.forward: x[:, :, :-chomp_size]."""
    # Note: chomp_size == 0 is rejected (PyTorch's x[..., :-0] would be empty,
    # not identity) — matches the module's intended usage in a causal TCN.
    assert chomp_size > 0, "chomp_size must be positive (matches x[..., :-c])"
    B, C, L = x.shape
    L_out = L - chomp_size
    assert L_out > 0, "chomp_size must be smaller than sequence length"

    itemsize = jnp.dtype(x.dtype).itemsize

    # Tiny-tensor fast path: the pallas_call launch + grid overhead dominates,
    # XLA's native slice-copy is strictly cheaper.
    if small_fast_path and B * C * L_out * itemsize <= _SMALL_FAST_PATH_BYTES:
        return x[:, :, :L_out]

    # Flatten (B, C) -> rows.  Free for a contiguous NCL tensor; gives one
    # large parallel row axis and removes the size-1 leading block dim.
    R = B * C
    x2 = x.reshape(R, L)

    sub = _SUBLANE_MULT.get(itemsize, 8)
    l_pad = _round_up(L_out, 128)  # lane-aligned cover of the kept columns

    if l_pad * sub * itemsize <= _TARGET_BLOCK_BYTES:
        # One L-tile covers all of L_out: spend the byte budget on rows.
        # Output stores are lane-dense/unmasked except at most one sub-128
        # tail; output DMAs are (near-)contiguous row runs.
        Lt = l_pad
        Rt = (_TARGET_BLOCK_BYTES // (Lt * itemsize)) // sub * sub
        Rt = max(sub, min(Rt, _round_up(R, sub)))
    else:
        # Very long rows: tile the length axis too.
        Rt = sub
        Lt = (_TARGET_BLOCK_BYTES // (Rt * itemsize)) // 128 * 128
        Lt = max(128, min(Lt, l_pad))

    grid = (pl.cdiv(R, Rt), pl.cdiv(L_out, Lt))
    block = (Rt, Lt)
    index_map = lambda r, l: (r, l)  # identical for input and output

    out2 = pl.pallas_call(
        _chomp_copy_kernel,
        out_shape=jax.ShapeDtypeStruct((R, L_out), x.dtype),
        grid=grid,
        in_specs=[pl.BlockSpec(block, index_map)],
        out_specs=pl.BlockSpec(block, index_map),
        compiler_params=pltpu.CompilerParams(
            # Both axes independent: shards across both TensorCores on v7x,
            # neutral on single-TC v5e/v6e.
            dimension_semantics=("parallel", "parallel"),
            # Raise v5e's 16 MiB default so the ~16 MiB pipelined footprint
            # of 4 MiB blocks fits everywhere with headroom.
            vmem_limit_bytes=32 * 1024 * 1024,
        ),
        # Pure mem-bound copy: read + write L_out columns per row.
        cost_estimate=pl.CostEstimate(
            flops=0,
            transcendentals=0,
            bytes_accessed=2 * R * L_out * itemsize,
        ),
    )(x2)
    return out2.reshape(B, C, L_out)


if __name__ == "__main__":
    # Chomp1d has no learnable parameters; only the chomp_size hyperparameter.
    chomp_size = 3
    B, C, L = 2, 4, 16

    key = jax.random.PRNGKey(0)
    x = jax.random.normal(key, (B, C, L), dtype=jnp.float32)

    # Force the Pallas path (demo tensor is small enough to hit the fast path
    # otherwise) so the kernel itself is compiled and executed.
    y = chomp1d(x, chomp_size, small_fast_path=False)
    y = jax.block_until_ready(y)
    y_ref = x[:, :, :-chomp_size]
    assert y.shape == (B, C, L - chomp_size), y.shape
    assert jnp.array_equal(y, y_ref), "mismatch vs reference slice (pallas path)"

    # Also exercise the default (fast-path) entry point.
    y_fast = jax.block_until_ready(chomp1d(x, chomp_size))
    assert jnp.array_equal(y_fast, y_ref), "mismatch vs reference slice (fast path)"

    # Second Pallas-path check with a different dtype / non-aligned length.
    k2 = jax.random.PRNGKey(0)
    x2 = jax.random.normal(k2, (2, 8, 300), dtype=jnp.bfloat16)
    y2 = jax.block_until_ready(chomp1d(x2, 5, small_fast_path=False))
    assert jnp.array_equal(y2, x2[:, :, :-5]), "mismatch vs reference slice (bf16)"

    print("KERNEL_OK")
</pallas_src>

<mosaic_0001>
module attributes {stable_mosaic.version = 11 : i64} {
  func.func @_chomp_copy_kernel(%arg0: i32, %arg1: i32, %arg2: memref<8x128xf32, #tpu.memory_space<vmem>>, %arg3: memref<8x128xf32, #tpu.memory_space<vmem>>) attributes {dimension_semantics = [#tpu.dimension_semantics<parallel>, #tpu.dimension_semantics<parallel>], iteration_bounds = array<i64: 1, 1>, scalar_prefetch = 0 : i64, scratch_operands = 0 : i64, tpu.core_type = #tpu.core_type<tc>, window_params = [{transform_indices = @transform_0, window_bounds = array<i64: 8, 128>}, {transform_indices = @transform_1, window_bounds = array<i64: 8, 128>}]} {
    %c0 = arith.constant 0 : index
    %c0_0 = arith.constant 0 : index
    %0 = vector.load %arg2[%c0, %c0_0] : memref<8x128xf32, #tpu.memory_space<vmem>>, vector<8x128xf32>
    %c0_1 = arith.constant 0 : index
    %c0_2 = arith.constant 0 : index
    %1 = vector.load %arg3[%c0_1, %c0_2] : memref<8x128xf32, #tpu.memory_space<vmem>>, vector<8x128xf32>
    tpu.vector_store %arg3[%c0_1, %c0_2], %0 {strides = array<i32>} : memref<8x128xf32, #tpu.memory_space<vmem>>, vector<8x128xf32>,
    return
  }
  func.func @transform_0(%arg0: i32, %arg1: i32) -> (i32, i32) {
    %c0_i32 = arith.constant 0 : i32
    return %arg0, %arg1 : i32, i32
  }
  func.func @transform_1(%arg0: i32, %arg1: i32) -> (i32, i32) {
    %c0_i32 = arith.constant 0 : i32
    return %arg0, %arg1 : i32, i32
  }
}

</mosaic_0001>

<llo_original>
// kernel: tpu_custom_call.1
$region0: #{tpu_custom_call.1}
  #allocation0 [shape = 'u32[]', space=smem, size = 0x4, offset = 0x4, fixed_abs, tag = 'smem constant byte address 0x4 - core index']
  #allocation1 [shape = 'u32[144,128]{1,0:T(1,128)}', space=vmem, size = 0x12000, scoped, tag = 'internal scratch']
  %s0 = inlined_call_operand.hbm [shape: f32[8,16], index: 0, kind: input, shape index: {}]
  %s1 = inlined_call_operand.hbm [shape: f32[8,13], index: 1, kind: output, shape index: {}]
  %s2 = sld [smem:[#allocation0]]
  $region18: #{tpu_custom_call.1} parent=0
    _
  %s4 = ssub.s32 1, %s2
  %s5 = scalar_select 0, %s4, %s2
  $region1: #{tpu_custom_call.1} parent=0
    #allocation2 [shape = 'u8[4096]{0}', space=vmem, size = 0x1000, scoped, tag = 'input window, operand 0, single buffered']
    #allocation3 [shape = 's32[1]{0}', space=sflag, size = 0x4, scoped, tag = 'scoped memory for tpu_custom_call.1']
    #allocation4 [shape = 's32[1]{0}', space=sflag, size = 0x4, scoped, tag = 'scoped memory for tpu_custom_call.1']
    #allocation5 [shape = 'u8[4096]{0}', space=vmem, size = 0x1000, scoped, tag = 'output window, operand 0, single buffered']
    %6 = vsyncpa [#allocation3], 0
    %7 = vsyncpa [#allocation4], 0
    // Predicated region
    $region2: #{tpu_custom_call.1} parent=1 // pred_check
      _
    $region3: #{tpu_custom_call.1} parent=1 // pred_check_branch
      %9 = sbr.rel (0) target = $region5
    $region4: #{tpu_custom_call.1} parent=1 // pred_region
      %s11 = ssub.s32 128, 128
      %12 = vsyncadd [#allocation3], %s11
      %s14 = sshll.u32 [#allocation2], 4
      %s15 = int_to_ptr.vmem [resolvable:$true] %s14
      %17 = dma.hbm_to_vmem [thread:$0]  %s0, 128, %s15, [#allocation3]
    $region5: #{tpu_custom_call.1} parent=1 // pred_fallthru
      _
    // Predicated region
    $region6: #{tpu_custom_call.1} parent=1 // pred_check
      _
    $region7: #{tpu_custom_call.1} parent=1 // pred_check_branch
      %19 = sbr.rel (0) target = $region9
    $region8: #{tpu_custom_call.1} parent=1 // pred_region
      %20 = dma.done [#allocation3], 128
    $region9: #{tpu_custom_call.1} parent=1 // pred_fallthru
      _
    %v21 = vld [vmem:[#allocation2] sm:$0xff]
    %22 = vst [vmem:[#allocation5] sm:$0xff] %v21
    // Predicated region
    $region10: #{tpu_custom_call.1} parent=1 // pred_check
      _
    $region11: #{tpu_custom_call.1} parent=1 // pred_check_branch
      %24 = sbr.rel (0) target = $region13
    $region12: #{tpu_custom_call.1} parent=1 // pred_region
      %s26 = ssub.s32 128, 128
      %27 = vsyncadd [#allocation4], %s26
      %s29 = sshll.u32 [#allocation5], 4
      %s30 = int_to_ptr.vmem [resolvable:$true] %s29
      %32 = dma.vmem_to_hbm [thread:$0]  %s30, 128, %s1, [#allocation4]
    $region13: #{tpu_custom_call.1} parent=1 // pred_fallthru
      _
    // Predicated region
    $region14: #{tpu_custom_call.1} parent=1 // pred_check
      _
    $region15: #{tpu_custom_call.1} parent=1 // pred_check_branch
      %34 = sbr.rel (0) target = $region17
    $region16: #{tpu_custom_call.1} parent=1 // pred_region
      %35 = dma.done [#allocation4], 128
    $region17: #{tpu_custom_call.1} parent=1 // pred_fallthru
      _
    %36 = vsyncpa [#allocation3], 1
    %37 = vsyncpa [#allocation4], 1

</llo_original>
